<compile_context>
chip_gen: v6e
topology: v6e:2x2x1
jax: 0.10.0
libtpu: 0.0.40
codegen_flags: <defaults>
</compile_context>

<pallas_src>
import jax
import jax.numpy as jnp
from jax.experimental import pallas as pl
from jax.experimental.pallas import tpu as pltpu

BN_EPS = 1e-5
F1_PAD = 512    # fc1 width 500 padded to 4*128
F2_PAD = 128    # fc2 width 50 padded to 128


def _round_up(x, m):
    return (x + m - 1) // m * m


def mlp_kernel(x_ref, cw_ref, cb_ref,
               w1_ref, g1_ref, be1_ref,
               w2_ref, g2_ref, be2_ref,
               w3_ref, b3_ref,
               o_ref, acc_ref):
    k = pl.program_id(0)

    @pl.when(k == 0)
    def _():
        acc_ref[...] = jnp.zeros_like(acc_ref)

    # Conv1dSame(2, 1, 1): pointwise channel mix on this K-chunk -> (B, tk).
    # x_ref[0]/x_ref[1] are leading-axis views (free).  conv bias is kept
    # (it cancels through BN anyway, but the broadcast add is one scalar op).
    h = x_ref[0] * cw_ref[0] + x_ref[1] * cw_ref[1] + cb_ref[0]

    # fc1 partial product over this K chunk (fc1 bias dropped: cancels in BN).
    acc_ref[...] += jnp.dot(h, w1_ref[...], preferred_element_type=jnp.float32)

    @pl.when(k == pl.num_programs(0) - 1)
    def _():
        # --- BN1 (train mode) folded into scale/shift, then ReLU ---
        h1 = acc_ref[...]                                   # (B, F1_PAD)
        mu1 = jnp.mean(h1, axis=0, keepdims=True)
        var1 = jnp.mean((h1 - mu1) ** 2, axis=0, keepdims=True)
        scale1 = g1_ref[...] * jax.lax.rsqrt(var1 + BN_EPS)
        shift1 = be1_ref[...] - mu1 * scale1
        h1 = jnp.maximum(h1 * scale1 + shift1, 0.0)

        # --- fc2 (bias dropped) + BN2 folded + ReLU ---
        h2 = jnp.dot(h1, w2_ref[...], preferred_element_type=jnp.float32)
        mu2 = jnp.mean(h2, axis=0, keepdims=True)
        var2 = jnp.mean((h2 - mu2) ** 2, axis=0, keepdims=True)
        scale2 = g2_ref[...] * jax.lax.rsqrt(var2 + BN_EPS)
        shift2 = be2_ref[...] - mu2 * scale2
        h2 = jnp.maximum(h2 * scale2 + shift2, 0.0)

        # --- fc3 (bias kept: no BN after it) ---
        o_ref[...] = (jnp.dot(h2, w3_ref[...], preferred_element_type=jnp.float32)
                      + b3_ref[...]).astype(o_ref.dtype)


def mlp_forward(x, p):
    B, _, T = x.shape
    n_classes = p["w3"].shape[1]
    nc_pad = _round_up(n_classes, 128)
    f1_real = p["w1"].shape[1]          # 500
    f2_real = p["w2"].shape[1]          # 50

    # K tile over the timeseries/contraction axis of fc1.
    tk = min(512, _round_up(T, 128))
    t_pad = _round_up(T, tk)
    grid_k = t_pad // tk

    # Wrapper-side layout plumbing: transpose to (2, B, T) and zero-pad the
    # contraction + feature dims so every kernel tile is lane-dense.
    xt = jnp.transpose(x, (1, 0, 2))
    xt = jnp.pad(xt, ((0, 0), (0, 0), (0, t_pad - T)))

    w1 = jnp.pad(p["w1"], ((0, t_pad - T), (0, F1_PAD - f1_real)))
    g1 = jnp.pad(p["g1"], ((0, 0), (0, F1_PAD - f1_real)))
    be1 = jnp.pad(p["be1"], ((0, 0), (0, F1_PAD - f1_real)))
    w2 = jnp.pad(p["w2"], ((0, F1_PAD - f1_real), (0, F2_PAD - f2_real)))
    g2 = jnp.pad(p["g2"], ((0, 0), (0, F2_PAD - f2_real)))
    be2 = jnp.pad(p["be2"], ((0, 0), (0, F2_PAD - f2_real)))
    w3 = jnp.pad(p["w3"], ((0, F2_PAD - f2_real), (0, nc_pad - n_classes)))
    b3 = jnp.pad(p["b3"], ((0, 0), (0, nc_pad - n_classes)))

    vmem = pltpu.MemorySpace.VMEM
    smem = pltpu.MemorySpace.SMEM

    flops = 2 * B * (t_pad * F1_PAD + F1_PAD * F2_PAD + F2_PAD * nc_pad)
    bytes_accessed = 4 * (xt.size + w1.size + w2.size + w3.size + B * nc_pad)

    out = pl.pallas_call(
        mlp_kernel,
        out_shape=jax.ShapeDtypeStruct((B, nc_pad), jnp.float32),
        grid_spec=pltpu.PrefetchScalarGridSpec(
            num_scalar_prefetch=0,
            grid=(grid_k,),
            in_specs=[
                pl.BlockSpec((2, B, tk), lambda k: (0, 0, k)),      # x chunk
                pl.BlockSpec(memory_space=smem),                     # conv_w
                pl.BlockSpec(memory_space=smem),                     # conv_b
                pl.BlockSpec((tk, F1_PAD), lambda k: (k, 0)),        # w1 chunk
                pl.BlockSpec((1, F1_PAD), lambda k: (0, 0)),         # g1
                pl.BlockSpec((1, F1_PAD), lambda k: (0, 0)),         # be1
                pl.BlockSpec((F1_PAD, F2_PAD), lambda k: (0, 0)),    # w2
                pl.BlockSpec((1, F2_PAD), lambda k: (0, 0)),         # g2
                pl.BlockSpec((1, F2_PAD), lambda k: (0, 0)),         # be2
                pl.BlockSpec((F2_PAD, nc_pad), lambda k: (0, 0)),    # w3
                pl.BlockSpec((1, nc_pad), lambda k: (0, 0)),         # b3
            ],
            out_specs=pl.BlockSpec((B, nc_pad), lambda k: (0, 0)),
            scratch_shapes=[pltpu.VMEM((B, F1_PAD), jnp.float32)],
        ),
        compiler_params=pltpu.CompilerParams(
            dimension_semantics=("arbitrary",),        # K axis is a reduction
            vmem_limit_bytes=64 * 1024 * 1024,
        ),
        cost_estimate=pl.CostEstimate(
            flops=flops,
            transcendentals=F1_PAD + F2_PAD,
            bytes_accessed=bytes_accessed,
        ),
    )(xt, p["conv_w"], p["conv_b"],
      w1, g1, be1, w2, g2, be2, w3, b3)

    return out[:, :n_classes]


def init_params(key, timeseries_length, n_classes):
    ks = jax.random.split(key, 8)
    f32 = jnp.float32

    def lin_w(k, fan_in, fan_out):
        bound = 1.0 / jnp.sqrt(fan_in)
        return jax.random.uniform(k, (fan_in, fan_out), f32, -bound, bound)

    def lin_b(k, fan_in, fan_out):
        bound = 1.0 / jnp.sqrt(fan_in)
        return jax.random.uniform(k, (1, fan_out), f32, -bound, bound)

    # Conv1dSame(2, 1, 1): weight (out=1, in=2, k=1), kaiming_uniform (fan_in=2)
    kaiming_bound = jnp.sqrt(6.0 / 2.0)
    conv_w = jax.random.uniform(ks[0], (2,), f32, -kaiming_bound, kaiming_bound)
    conv_b = jax.random.uniform(ks[1], (1,), f32, -1.0 / jnp.sqrt(2.0), 1.0 / jnp.sqrt(2.0))

    return dict(
        conv_w=conv_w, conv_b=conv_b,
        w1=lin_w(ks[2], timeseries_length, 500), b1=lin_b(ks[3], timeseries_length, 500),
        g1=jnp.ones((1, 500), f32), be1=jnp.zeros((1, 500), f32),
        w2=lin_w(ks[4], 500, 50), b2=lin_b(ks[5], 500, 50),
        g2=jnp.ones((1, 50), f32), be2=jnp.zeros((1, 50), f32),
        w3=lin_w(ks[6], 50, 10), b3=lin_b(ks[7], 50, 10),
    )


def mlp_reference(x, p):
    # Pure-JAX reference (keeps the fc1/fc2 biases; they cancel through BN,
    # so the kernel that drops them must still match within f32 rounding).
    h = x[:, 0, :] * p["conv_w"][0] + x[:, 1, :] * p["conv_w"][1] + p["conv_b"][0]

    def bn(h, g, b):
        mu = jnp.mean(h, axis=0, keepdims=True)
        var = jnp.mean((h - mu) ** 2, axis=0, keepdims=True)
        return (h - mu) * jax.lax.rsqrt(var + BN_EPS) * g + b

    h = jnp.maximum(bn(h @ p["w1"] + p["b1"], p["g1"], p["be1"]), 0.0)
    h = jnp.maximum(bn(h @ p["w2"] + p["b2"], p["g2"], p["be2"]), 0.0)
    return h @ p["w3"] + p["b3"]


if __name__ == "__main__":
    B, T, n_classes = 8, 16, 10
    key = jax.random.PRNGKey(0)
    kx, kp = jax.random.split(key)
    x = jax.random.normal(kx, (B, 2, T), jnp.float32)
    params = init_params(kp, T, n_classes)

    out = mlp_forward(x, params)
    out = jax.block_until_ready(out)

    ref = mlp_reference(x, params)
    assert out.shape == (B, n_classes)
    assert jnp.allclose(out, ref, atol=1e-3, rtol=1e-3), "mismatch vs reference"

    print("KERNEL_OK")
</pallas_src>

<mosaic_0001>
module attributes {stable_mosaic.version = 11 : i64} {
  func.func @mlp_kernel(%arg0: i32, %arg1: memref<2x8x128xf32, #tpu.memory_space<vmem>>, %arg2: memref<2xf32, #tpu.memory_space<smem>>, %arg3: memref<1xf32, #tpu.memory_space<smem>>, %arg4: memref<128x512xf32, #tpu.memory_space<vmem>>, %arg5: memref<1x512xf32, #tpu.memory_space<vmem>>, %arg6: memref<1x512xf32, #tpu.memory_space<vmem>>, %arg7: memref<512x128xf32, #tpu.memory_space<vmem>>, %arg8: memref<1x128xf32, #tpu.memory_space<vmem>>, %arg9: memref<1x128xf32, #tpu.memory_space<vmem>>, %arg10: memref<128x128xf32, #tpu.memory_space<vmem>>, %arg11: memref<1x128xf32, #tpu.memory_space<vmem>>, %arg12: memref<8x128xf32, #tpu.memory_space<vmem>>, %arg13: memref<8x512xf32, #tpu.memory_space<vmem>>) attributes {dimension_semantics = [#tpu.dimension_semantics<arbitrary>], iteration_bounds = array<i64: 1>, scalar_prefetch = 0 : i64, scratch_operands = 1 : i64, tpu.core_type = #tpu.core_type<tc>, window_params = [{transform_indices = @transform_0, window_bounds = array<i64: 2, 8, 128>}, {transform_indices = @transform_1, window_bounds = array<i64: 2>}, {transform_indices = @transform_2, window_bounds = array<i64: 1>}, {transform_indices = @transform_3, window_bounds = array<i64: 128, 512>}, {pipeline_mode = #tpu.pipeline_mode<synchronous>, transform_indices = @transform_4, window_bounds = array<i64: 1, 512>}, {pipeline_mode = #tpu.pipeline_mode<synchronous>, transform_indices = @transform_5, window_bounds = array<i64: 1, 512>}, {pipeline_mode = #tpu.pipeline_mode<synchronous>, transform_indices = @transform_6, window_bounds = array<i64: 512, 128>}, {pipeline_mode = #tpu.pipeline_mode<synchronous>, transform_indices = @transform_7, window_bounds = array<i64: 1, 128>}, {pipeline_mode = #tpu.pipeline_mode<synchronous>, transform_indices = @transform_8, window_bounds = array<i64: 1, 128>}, {pipeline_mode = #tpu.pipeline_mode<synchronous>, transform_indices = @transform_9, window_bounds = array<i64: 128, 128>}, {pipeline_mode = #tpu.pipeline_mode<synchronous>, transform_indices = @transform_10, window_bounds = array<i64: 1, 128>}, {pipeline_mode = #tpu.pipeline_mode<synchronous>, transform_indices = @transform_11, window_bounds = array<i64: 8, 128>}]} {
    %c0_i32 = arith.constant 0 : i32
    %0 = arith.cmpi eq, %arg0, %c0_i32 : i32
    %1 = arith.extui %0 : i1 to i32
    %c0_i32_0 = arith.constant 0 : i32
    %2 = arith.cmpi ne, %1, %c0_i32_0 : i32
    scf.if %2 {
      %cst_16 = arith.constant 0.000000e+00 : f32
      %25 = vector.broadcast %cst_16 : f32 to vector<8x512xf32>
      %c0_17 = arith.constant 0 : index
      %c0_18 = arith.constant 0 : index
      %26 = vector.load %arg13[%c0_17, %c0_18] : memref<8x512xf32, #tpu.memory_space<vmem>>, vector<8x512xf32>
      tpu.vector_store %arg13[%c0_17, %c0_18], %25 {strides = array<i32>} : memref<8x512xf32, #tpu.memory_space<vmem>>, vector<8x512xf32>,
    } else {
    }
    %c0 = arith.constant 0 : index
    %c0_1 = arith.constant 0 : index
    %c0_2 = arith.constant 0 : index
    %3 = vector.load %arg1[%c0, %c0_1, %c0_2] : memref<2x8x128xf32, #tpu.memory_space<vmem>>, vector<1x8x128xf32>
    %4 = vector.shape_cast %3 : vector<1x8x128xf32> to vector<8x128xf32>
    %c0_3 = arith.constant 0 : index
    %5 = memref.load %arg2[%c0_3] : memref<2xf32, #tpu.memory_space<smem>>
    %6 = vector.broadcast %5 : f32 to vector<8x128xf32>
    %7 = arith.mulf %4, %6 : vector<8x128xf32>
    %c1 = arith.constant 1 : index
    %c0_4 = arith.constant 0 : index
    %c0_5 = arith.constant 0 : index
    %8 = vector.load %arg1[%c1, %c0_4, %c0_5] : memref<2x8x128xf32, #tpu.memory_space<vmem>>, vector<1x8x128xf32>
    %9 = vector.shape_cast %8 : vector<1x8x128xf32> to vector<8x128xf32>
    %c1_6 = arith.constant 1 : index
    %10 = memref.load %arg2[%c1_6] : memref<2xf32, #tpu.memory_space<smem>>
    %11 = vector.broadcast %10 : f32 to vector<8x128xf32>
    %12 = arith.mulf %9, %11 : vector<8x128xf32>
    %13 = arith.addf %7, %12 : vector<8x128xf32>
    %c0_7 = arith.constant 0 : index
    %14 = memref.load %arg3[%c0_7] : memref<1xf32, #tpu.memory_space<smem>>
    %15 = vector.broadcast %14 : f32 to vector<8x128xf32>
    %16 = arith.addf %13, %15 : vector<8x128xf32>
    %c0_8 = arith.constant 0 : index
    %c0_9 = arith.constant 0 : index
    %17 = vector.load %arg13[%c0_8, %c0_9] : memref<8x512xf32, #tpu.memory_space<vmem>>, vector<8x512xf32>
    %c0_10 = arith.constant 0 : index
    %c0_11 = arith.constant 0 : index
    %18 = vector.load %arg4[%c0_10, %c0_11] : memref<128x512xf32, #tpu.memory_space<vmem>>, vector<128x512xf32>
    %cst = arith.constant dense<0.000000e+00> : vector<8x512xf32>
    %19 = tpu.matmul %16, %18, %cst {dimension_numbers = #tpu.dot_dimension_numbers<[1], [0], [0], [1], [0, 0, 1, 1], [], []>} : vector<8x128xf32>, vector<128x512xf32>, vector<8x512xf32> -> vector<8x512xf32>
    %20 = arith.addf %17, %19 : vector<8x512xf32>
    %c0_12 = arith.constant 0 : index
    %c0_13 = arith.constant 0 : index
    %21 = vector.load %arg13[%c0_12, %c0_13] : memref<8x512xf32, #tpu.memory_space<vmem>>, vector<8x512xf32>
    tpu.vector_store %arg13[%c0_12, %c0_13], %20 {strides = array<i32>} : memref<8x512xf32, #tpu.memory_space<vmem>>, vector<8x512xf32>,
    %c0_i32_14 = arith.constant 0 : i32
    %22 = arith.cmpi eq, %arg0, %c0_i32_14 : i32
    %23 = arith.extui %22 : i1 to i32
    %c0_i32_15 = arith.constant 0 : i32
    %24 = arith.cmpi ne, %23, %c0_i32_15 : i32
    scf.if %24 {
      %c0_16 = arith.constant 0 : index
      %c0_17 = arith.constant 0 : index
      %25 = vector.load %arg13[%c0_16, %c0_17] : memref<8x512xf32, #tpu.memory_space<vmem>>, vector<8x512xf32>
      %cst_18 = arith.constant dense<0.000000e+00> : vector<512xf32>
      %26 = vector.multi_reduction <add>, %25, %cst_18 [0] : vector<8x512xf32> to vector<512xf32>
      %27 = vector.shape_cast %26 : vector<512xf32> to vector<1x512xf32>
      %cst_19 = arith.constant 8.000000e+00 : f32
      %28 = vector.broadcast %cst_19 : f32 to vector<1x512xf32>
      %29 = arith.divf %27, %28 : vector<1x512xf32>
      %30 = vector.broadcast %29 : vector<1x512xf32> to vector<8x512xf32>
      %31 = arith.subf %25, %30 : vector<8x512xf32>
      %32 = arith.mulf %31, %31 : vector<8x512xf32>
      %cst_20 = arith.constant dense<0.000000e+00> : vector<512xf32>
      %33 = vector.multi_reduction <add>, %32, %cst_20 [0] : vector<8x512xf32> to vector<512xf32>
      %34 = vector.shape_cast %33 : vector<512xf32> to vector<1x512xf32>
      %cst_21 = arith.constant 8.000000e+00 : f32
      %35 = vector.broadcast %cst_21 : f32 to vector<1x512xf32>
      %36 = arith.divf %34, %35 : vector<1x512xf32>
      %c0_22 = arith.constant 0 : index
      %c0_23 = arith.constant 0 : index
      %37 = vector.load %arg5[%c0_22, %c0_23] : memref<1x512xf32, #tpu.memory_space<vmem>>, vector<1x512xf32>
      %cst_24 = arith.constant 9.99999974E-6 : f32
      %38 = vector.broadcast %cst_24 : f32 to vector<1x512xf32>
      %39 = arith.addf %36, %38 : vector<1x512xf32>
      %40 = math.rsqrt %39 : vector<1x512xf32>
      %41 = arith.mulf %37, %40 : vector<1x512xf32>
      %c0_25 = arith.constant 0 : index
      %c0_26 = arith.constant 0 : index
      %42 = vector.load %arg6[%c0_25, %c0_26] : memref<1x512xf32, #tpu.memory_space<vmem>>, vector<1x512xf32>
      %43 = arith.mulf %29, %41 : vector<1x512xf32>
      %44 = arith.subf %42, %43 : vector<1x512xf32>
      %45 = vector.broadcast %41 : vector<1x512xf32> to vector<8x512xf32>
      %46 = arith.mulf %25, %45 : vector<8x512xf32>
      %47 = vector.broadcast %44 : vector<1x512xf32> to vector<8x512xf32>
      %48 = arith.addf %46, %47 : vector<8x512xf32>
      %cst_27 = arith.constant 0.000000e+00 : f32
      %49 = vector.broadcast %cst_27 : f32 to vector<8x512xf32>
      %50 = arith.maximumf %48, %49 : vector<8x512xf32>
      %c0_28 = arith.constant 0 : index
      %c0_29 = arith.constant 0 : index
      %51 = vector.load %arg7[%c0_28, %c0_29] : memref<512x128xf32, #tpu.memory_space<vmem>>, vector<512x128xf32>
      %cst_30 = arith.constant dense<0.000000e+00> : vector<8x128xf32>
      %52 = tpu.matmul %50, %51, %cst_30 {dimension_numbers = #tpu.dot_dimension_numbers<[1], [0], [0], [1], [0, 0, 1, 1], [], []>} : vector<8x512xf32>, vector<512x128xf32>, vector<8x128xf32> -> vector<8x128xf32>
      %cst_31 = arith.constant dense<0.000000e+00> : vector<128xf32>
      %53 = vector.multi_reduction <add>, %52, %cst_31 [0] : vector<8x128xf32> to vector<128xf32>
      %54 = vector.shape_cast %53 : vector<128xf32> to vector<1x128xf32>
      %cst_32 = arith.constant 8.000000e+00 : f32
      %55 = vector.broadcast %cst_32 : f32 to vector<1x128xf32>
      %56 = arith.divf %54, %55 : vector<1x128xf32>
      %57 = vector.broadcast %56 : vector<1x128xf32> to vector<8x128xf32>
      %58 = arith.subf %52, %57 : vector<8x128xf32>
      %59 = arith.mulf %58, %58 : vector<8x128xf32>
      %cst_33 = arith.constant dense<0.000000e+00> : vector<128xf32>
      %60 = vector.multi_reduction <add>, %59, %cst_33 [0] : vector<8x128xf32> to vector<128xf32>
      %61 = vector.shape_cast %60 : vector<128xf32> to vector<1x128xf32>
      %cst_34 = arith.constant 8.000000e+00 : f32
      %62 = vector.broadcast %cst_34 : f32 to vector<1x128xf32>
      %63 = arith.divf %61, %62 : vector<1x128xf32>
      %c0_35 = arith.constant 0 : index
      %c0_36 = arith.constant 0 : index
      %64 = vector.load %arg8[%c0_35, %c0_36] : memref<1x128xf32, #tpu.memory_space<vmem>>, vector<1x128xf32>
      %cst_37 = arith.constant 9.99999974E-6 : f32
      %65 = vector.broadcast %cst_37 : f32 to vector<1x128xf32>
      %66 = arith.addf %63, %65 : vector<1x128xf32>
      %67 = math.rsqrt %66 : vector<1x128xf32>
      %68 = arith.mulf %64, %67 : vector<1x128xf32>
      %c0_38 = arith.constant 0 : index
      %c0_39 = arith.constant 0 : index
      %69 = vector.load %arg9[%c0_38, %c0_39] : memref<1x128xf32, #tpu.memory_space<vmem>>, vector<1x128xf32>
      %70 = arith.mulf %56, %68 : vector<1x128xf32>
      %71 = arith.subf %69, %70 : vector<1x128xf32>
      %72 = vector.broadcast %68 : vector<1x128xf32> to vector<8x128xf32>
      %73 = arith.mulf %52, %72 : vector<8x128xf32>
      %74 = vector.broadcast %71 : vector<1x128xf32> to vector<8x128xf32>
      %75 = arith.addf %73, %74 : vector<8x128xf32>
      %cst_40 = arith.constant 0.000000e+00 : f32
      %76 = vector.broadcast %cst_40 : f32 to vector<8x128xf32>
      %77 = arith.maximumf %75, %76 : vector<8x128xf32>
      %c0_41 = arith.constant 0 : index
      %c0_42 = arith.constant 0 : index
      %78 = vector.load %arg10[%c0_41, %c0_42] : memref<128x128xf32, #tpu.memory_space<vmem>>, vector<128x128xf32>
      %cst_43 = arith.constant dense<0.000000e+00> : vector<8x128xf32>
      %79 = tpu.matmul %77, %78, %cst_43 {dimension_numbers = #tpu.dot_dimension_numbers<[1], [0], [0], [1], [0, 0, 1, 1], [], []>} : vector<8x128xf32>, vector<128x128xf32>, vector<8x128xf32> -> vector<8x128xf32>
      %c0_44 = arith.constant 0 : index
      %c0_45 = arith.constant 0 : index
      %80 = vector.load %arg11[%c0_44, %c0_45] : memref<1x128xf32, #tpu.memory_space<vmem>>, vector<1x128xf32>
      %81 = vector.broadcast %80 : vector<1x128xf32> to vector<8x128xf32>
      %82 = arith.addf %79, %81 : vector<8x128xf32>
      %c0_46 = arith.constant 0 : index
      %c0_47 = arith.constant 0 : index
      %83 = vector.load %arg12[%c0_46, %c0_47] : memref<8x128xf32, #tpu.memory_space<vmem>>, vector<8x128xf32>
      tpu.vector_store %arg12[%c0_46, %c0_47], %82 {strides = array<i32>} : memref<8x128xf32, #tpu.memory_space<vmem>>, vector<8x128xf32>,
    } else {
    }
    return
  }
  func.func @transform_0(%arg0: i32) -> (i32, i32, i32) {
    %c0_i32 = arith.constant 0 : i32
    %c0_i32_0 = arith.constant 0 : i32
    %c0_i32_1 = arith.constant 0 : i32
    return %c0_i32, %c0_i32_0, %arg0 : i32, i32, i32
  }
  func.func @transform_1(%arg0: i32) -> i32 {
    %c0_i32 = arith.constant 0 : i32
    %c0_i32_0 = arith.constant 0 : i32
    return %c0_i32 : i32
  }
  func.func @transform_2(%arg0: i32) -> i32 {
    %c0_i32 = arith.constant 0 : i32
    %c0_i32_0 = arith.constant 0 : i32
    return %c0_i32 : i32
  }
  func.func @transform_3(%arg0: i32) -> (i32, i32) {
    %c0_i32 = arith.constant 0 : i32
    %c0_i32_0 = arith.constant 0 : i32
    return %arg0, %c0_i32 : i32, i32
  }
  func.func @transform_4(%arg0: i32) -> (i32, i32) {
    %c0_i32 = arith.constant 0 : i32
    %c0_i32_0 = arith.constant 0 : i32
    %c0_i32_1 = arith.constant 0 : i32
    return %c0_i32, %c0_i32_0 : i32, i32
  }
  func.func @transform_5(%arg0: i32) -> (i32, i32) {
    %c0_i32 = arith.constant 0 : i32
    %c0_i32_0 = arith.constant 0 : i32
    %c0_i32_1 = arith.constant 0 : i32
    return %c0_i32, %c0_i32_0 : i32, i32
  }
  func.func @transform_6(%arg0: i32) -> (i32, i32) {
    %c0_i32 = arith.constant 0 : i32
    %c0_i32_0 = arith.constant 0 : i32
    %c0_i32_1 = arith.constant 0 : i32
    return %c0_i32, %c0_i32_0 : i32, i32
  }
  func.func @transform_7(%arg0: i32) -> (i32, i32) {
    %c0_i32 = arith.constant 0 : i32
    %c0_i32_0 = arith.constant 0 : i32
    %c0_i32_1 = arith.constant 0 : i32
    return %c0_i32, %c0_i32_0 : i32, i32
  }
  func.func @transform_8(%arg0: i32) -> (i32, i32) {
    %c0_i32 = arith.constant 0 : i32
    %c0_i32_0 = arith.constant 0 : i32
    %c0_i32_1 = arith.constant 0 : i32
    return %c0_i32, %c0_i32_0 : i32, i32
  }
  func.func @transform_9(%arg0: i32) -> (i32, i32) {
    %c0_i32 = arith.constant 0 : i32
    %c0_i32_0 = arith.constant 0 : i32
    %c0_i32_1 = arith.constant 0 : i32
    return %c0_i32, %c0_i32_0 : i32, i32
  }
  func.func @transform_10(%arg0: i32) -> (i32, i32) {
    %c0_i32 = arith.constant 0 : i32
    %c0_i32_0 = arith.constant 0 : i32
    %c0_i32_1 = arith.constant 0 : i32
    return %c0_i32, %c0_i32_0 : i32, i32
  }
  func.func @transform_11(%arg0: i32) -> (i32, i32) {
    %c0_i32 = arith.constant 0 : i32
    %c0_i32_0 = arith.constant 0 : i32
    %c0_i32_1 = arith.constant 0 : i32
    return %c0_i32, %c0_i32_0 : i32, i32
  }
}

</mosaic_0001>

<llo_original>
// kernel: tpu_custom_call.1
$region0: #{tpu_custom_call.1}
  #allocation0 [shape = 'u32[]', space=smem, size = 0x4, offset = 0x4, fixed_abs, tag = 'smem constant byte address 0x4 - core index']
  #allocation1 [shape = 'u32[144,128]{1,0:T(1,128)}', space=vmem, size = 0x12000, scoped, tag = 'internal scratch']
  #allocation2 [shape = 'f32[8,512]{1,0:T(8,128)}', space=vmem, size = 0x4000, scoped, tag = 'scratch operand']
  #allocation3 [shape = 'f32[1]{0:T(128)S(6)}', space=smem, size = 0x200, scoped, tag = 'scoped memory for tpu_custom_call.1']
  %s0 = inlined_call_operand.hbm [shape: f32[2,8,128], index: 0, kind: input, shape index: {}]
  %s1 = inlined_call_operand.vmem [shape: f32[2], index: 1, kind: input, shape index: {}]
  %s2 = inlined_call_operand.<no memory space> [shape: f32[1], index: 2, kind: input, shape index: {}]
  %s3 = inlined_call_operand.hbm [shape: f32[128,512], index: 3, kind: input, shape index: {}]
  %s4 = inlined_call_operand.vmem [shape: f32[1,512], index: 4, kind: input, shape index: {}]
  %s5 = inlined_call_operand.vmem [shape: f32[1,512], index: 5, kind: input, shape index: {}]
  %s6 = inlined_call_operand.hbm [shape: f32[512,128], index: 6, kind: input, shape index: {}]
  %s7 = inlined_call_operand.vmem [shape: f32[1,128], index: 7, kind: input, shape index: {}]
  %s8 = inlined_call_operand.vmem [shape: f32[1,128], index: 8, kind: input, shape index: {}]
  %s9 = inlined_call_operand.hbm [shape: f32[128,128], index: 9, kind: input, shape index: {}]
  %s10 = inlined_call_operand.vmem [shape: f32[1,128], index: 10, kind: input, shape index: {}]
  %s11 = inlined_call_operand.hbm [shape: f32[8,128], index: 11, kind: output, shape index: {}]
  %s12 = sld [smem:[#allocation0]]
  $region82: #{tpu_custom_call.1} parent=0
    _
  %s14 = ssub.s32 1, %s12
  %s15 = scalar_select 0, %s14, %s12
  %16 = sst [smem:[#allocation3]] %s2
  $region1: #{tpu_custom_call.1} parent=0
    #allocation4 [shape = 'u8[8192]{0}', space=vmem, size = 0x2000, scoped, tag = 'input window, operand 0, single buffered']
    #allocation5 [shape = 's32[1]{0}', space=sflag, size = 0x4, scoped, tag = 'scoped memory for tpu_custom_call.1']
    #allocation6 [shape = 's32[1]{0}', space=sflag, size = 0x4, scoped, tag = 'scoped memory for tpu_custom_call.1']
    #allocation7 [shape = 's32[1]{0}', space=sflag, size = 0x4, scoped, tag = 'scoped memory for tpu_custom_call.1']
    #allocation8 [shape = 'u8[512]{0}', space=smem, size = 0x200, scoped, tag = 'input window, operand 1, single buffered']
    #allocation9 [shape = 'u8[262144]{0}', space=vmem, size = 0x40000, scoped, tag = 'input window, operand 3, single buffered']
    #allocation10 [shape = 's32[1]{0}', space=sflag, size = 0x4, scoped, tag = 'scoped memory for tpu_custom_call.1']
    #allocation11 [shape = 'u8[262144]{0}', space=vmem, size = 0x40000, scoped, tag = 'input window, operand 6, single buffered']
    #allocation12 [shape = 'u8[65536]{0}', space=vmem, size = 0x10000, scoped, tag = 'input window, operand 9, single buffered']
    #allocation13 [shape = 's32[1]{0}', space=sflag, size = 0x4, scoped, tag = 'scoped memory for tpu_custom_call.1']
    #allocation14 [shape = 'u8[4096]{0}', space=vmem, size = 0x1000, scoped, tag = 'output window, operand 0, single buffered']
    %17 = vsyncpa [#allocation5], 0
    %18 = vsyncpa [#allocation7], 0
    %19 = vsyncpa [#allocation10], 0
    %20 = vsyncpa [#allocation13], 0
    %21 = vsyncpa [#allocation6], 0
    // Predicated region
    $region2: #{tpu_custom_call.1} parent=1 // pred_check
      _
    $region3: #{tpu_custom_call.1} parent=1 // pred_check_branch
      %23 = sbr.rel (0) target = $region5
    $region4: #{tpu_custom_call.1} parent=1 // pred_region
      %s25 = ssub.s32 256, 256
      %26 = vsyncadd [#allocation5], %s25
      %s27 = sshll.u32 [#allocation4], 4
      %s28 = int_to_ptr.vmem [resolvable:$true] %s27
      %33 = dma.hbm_to_vmem [thread:$0]  %s0, 256, %s28, [#allocation5], 128, 128, 8
    $region5: #{tpu_custom_call.1} parent=1 // pred_fallthru
      _
    // Predicated region
    $region6: #{tpu_custom_call.1} parent=1 // pred_check
      _
    $region7: #{tpu_custom_call.1} parent=1 // pred_check_branch
      %35 = sbr.rel (0) target = $region9
    $region8: #{tpu_custom_call.1} parent=1 // pred_region
      %s37 = ssub.s32 16, 16
      %38 = vsyncadd [#allocation7], %s37
      %s40 = sshll.u32 %s1, 4
      %s41 = int_to_ptr.vmem [resolvable:$true] %s40
      %43 = dma.vmem_to_smem %s41, 16, [#allocation8], [#allocation7]
    $region9: #{tpu_custom_call.1} parent=1 // pred_fallthru
      _
    // Predicated region
    $region10: #{tpu_custom_call.1} parent=1 // pred_check
      _
    $region11: #{tpu_custom_call.1} parent=1 // pred_check_branch
      %45 = sbr.rel (0) target = $region13
    $region12: #{tpu_custom_call.1} parent=1 // pred_region
      _
    $region13: #{tpu_custom_call.1} parent=1 // pred_fallthru
      _
    // Predicated region
    $region14: #{tpu_custom_call.1} parent=1 // pred_check
      _
    $region15: #{tpu_custom_call.1} parent=1 // pred_check_branch
      %47 = sbr.rel (0) target = $region17
    $region16: #{tpu_custom_call.1} parent=1 // pred_region
      %s49 = ssub.s32 8192, 8192
      %50 = vsyncadd [#allocation10], %s49
      %s51 = sshll.u32 [#allocation9], 4
      %s52 = int_to_ptr.vmem [resolvable:$true] %s51
      %57 = dma.hbm_to_vmem [thread:$0]  %s3, 8192, %s52, [#allocation10], 512, 512, 32
    $region17: #{tpu_custom_call.1} parent=1 // pred_fallthru
      _
    // Predicated region
    $region18: #{tpu_custom_call.1} parent=1 // pred_check
      _
    $region19: #{tpu_custom_call.1} parent=1 // pred_check_branch
      %59 = sbr.rel (0) target = $region21
    $region20: #{tpu_custom_call.1} parent=1 // pred_region
      _
    $region21: #{tpu_custom_call.1} parent=1 // pred_fallthru
      _
    // Predicated region
    $region22: #{tpu_custom_call.1} parent=1 // pred_check
      _
    $region23: #{tpu_custom_call.1} parent=1 // pred_check_branch
      %61 = sbr.rel (0) target = $region25
    $region24: #{tpu_custom_call.1} parent=1 // pred_region
      _
    $region25: #{tpu_custom_call.1} parent=1 // pred_fallthru
      _
    // Predicated region
    $region26: #{tpu_custom_call.1} parent=1 // pred_check
      _
    $region27: #{tpu_custom_call.1} parent=1 // pred_check_branch
      %63 = sbr.rel (0) target = $region29
    $region28: #{tpu_custom_call.1} parent=1 // pred_region
      %s65 = ssub.s32 8192, 8192
      %66 = vsyncadd [#allocation10], %s65
      %s67 = sshll.u32 [#allocation11], 4
      %s68 = int_to_ptr.vmem [resolvable:$true] %s67
      %73 = dma.hbm_to_vmem [thread:$0]  %s6, 8192, %s68, [#allocation10], 128, 128, 8
    $region29: #{tpu_custom_call.1} parent=1 // pred_fallthru
      _
    // Predicated region
    $region30: #{tpu_custom_call.1} parent=1 // pred_check
      _
    $region31: #{tpu_custom_call.1} parent=1 // pred_check_branch
      %75 = sbr.rel (0) target = $region33
    $region32: #{tpu_custom_call.1} parent=1 // pred_region
      _
    $region33: #{tpu_custom_call.1} parent=1 // pred_fallthru
      _
    // Predicated region
    $region34: #{tpu_custom_call.1} parent=1 // pred_check
      _
    $region35: #{tpu_custom_call.1} parent=1 // pred_check_branch
      %77 = sbr.rel (0) target = $region37
    $region36: #{tpu_custom_call.1} parent=1 // pred_region
      _
    $region37: #{tpu_custom_call.1} parent=1 // pred_fallthru
      _
    // Predicated region
    $region38: #{tpu_custom_call.1} parent=1 // pred_check
      _
    $region39: #{tpu_custom_call.1} parent=1 // pred_check_branch
      %79 = sbr.rel (0) target = $region41
    $region40: #{tpu_custom_call.1} parent=1 // pred_region
      %s81 = ssub.s32 2048, 2048
      %82 = vsyncadd [#allocation13], %s81
      %s83 = sshll.u32 [#allocation12], 4
      %s84 = int_to_ptr.vmem [resolvable:$true] %s83
      %89 = dma.hbm_to_vmem [thread:$0]  %s9, 2048, %s84, [#allocation13], 128, 128, 8
    $region41: #{tpu_custom_call.1} parent=1 // pred_fallthru
      _
    // Predicated region
    $region42: #{tpu_custom_call.1} parent=1 // pred_check
      _
    $region43: #{tpu_custom_call.1} parent=1 // pred_check_branch
      %91 = sbr.rel (0) target = $region45
    $region44: #{tpu_custom_call.1} parent=1 // pred_region
      _
    $region45: #{tpu_custom_call.1} parent=1 // pred_fallthru
      _
    // Predicated region
    $region46: #{tpu_custom_call.1} parent=1 // pred_check
      _
    $region47: #{tpu_custom_call.1} parent=1 // pred_check_branch
      %93 = sbr.rel (0) target = $region49
    $region48: #{tpu_custom_call.1} parent=1 // pred_region
      %94 = dma.done [#allocation5], 256
    $region49: #{tpu_custom_call.1} parent=1 // pred_fallthru
      _
    // Predicated region
    $region50: #{tpu_custom_call.1} parent=1 // pred_check
      _
    $region51: #{tpu_custom_call.1} parent=1 // pred_check_branch
      %96 = sbr.rel (0) target = $region53
    $region52: #{tpu_custom_call.1} parent=1 // pred_region
      %97 = dma.done [#allocation7], 16
    $region53: #{tpu_custom_call.1} parent=1 // pred_fallthru
      _
    // Predicated region
    $region54: #{tpu_custom_call.1} parent=1 // pred_check
      _
    $region55: #{tpu_custom_call.1} parent=1 // pred_check_branch
      %99 = sbr.rel (0) target = $region57
    $region56: #{tpu_custom_call.1} parent=1 // pred_region
      %100 = dma.done [#allocation10], 8192
    $region57: #{tpu_custom_call.1} parent=1 // pred_fallthru
      _
    // Predicated region
    $region58: #{tpu_custom_call.1} parent=1 // pred_check
      _
    $region59: #{tpu_custom_call.1} parent=1 // pred_check_branch
      %102 = sbr.rel (0) target = $region61
    $region60: #{tpu_custom_call.1} parent=1 // pred_region
      %103 = dma.done [#allocation10], 8192
    $region61: #{tpu_custom_call.1} parent=1 // pred_fallthru
      _
    // Predicated region
    $region62: #{tpu_custom_call.1} parent=1 // pred_check
      _
    $region63: #{tpu_custom_call.1} parent=1 // pred_check_branch
      %105 = sbr.rel (0) target = $region65
    $region64: #{tpu_custom_call.1} parent=1 // pred_region
      %106 = dma.done [#allocation13], 2048
    $region65: #{tpu_custom_call.1} parent=1 // pred_fallthru
      _
    %107 = sfence
    %p108 = scmp.eq.s32.totalorder 0, 0
    // Predicated region
    $region66: #{tpu_custom_call.1} parent=1 // pred_check
      %p109 = pneg %p108
    $region67: #{tpu_custom_call.1} parent=1 // pred_check_branch
      %111 = sbr.rel (%p109) target = $region69
    $region68: #{tpu_custom_call.1} parent=1 // pred_region
      %112 = vst [vmem:[#allocation2] sm:$0xff] 0.0
      %113 = vst [vmem:[#allocation2 + $0x8] sm:$0xff] 0.0
      %114 = vst [vmem:[#allocation2 + $0x10] sm:$0xff] 0.0
      %115 = vst [vmem:[#allocation2 + $0x18] sm:$0xff] 0.0
    $region69: #{tpu_custom_call.1} parent=1 // pred_fallthru
      _
    %v116 = vld [vmem:[#allocation4] sm:$0xff]
    %s117 = sld [smem:[#allocation8]]
    %v118 = vstv %s117
    %v119 = vmul.f32 %v116, %v118
    %s120 = scalar_lea.vmem [#allocation4], 8
    %v121 = vld [vmem:[%s120] sm:$0xff]
    %s122 = sld [smem:[#allocation8 + $0x1]]
    %v123 = vstv %s122
    %v124 = vmul.f32 %v121, %v123
    %v125 = vadd.f32 %v119, %v124
    %s126 = sld [smem:[#allocation3]]
    %v127 = vstv %s126
    %v128 = vadd.f32 %v125, %v127
    %v129 = vld [vmem:[#allocation2] sm:$0xff]
    %v130 = vld [vmem:[#allocation2 + $0x8] sm:$0xff]
    %v131 = vld [vmem:[#allocation2 + $0x10] sm:$0xff]
    %v132 = vld [vmem:[#allocation2 + $0x18] sm:$0xff]
    %v133 = vld [vmem:[#allocation9] sm:$0xff]
    %v134 = vld [vmem:[#allocation9 + $0x8] sm:$0xff]
    %v135 = vld [vmem:[#allocation9 + $0x10] sm:$0xff]
    %v136 = vld [vmem:[#allocation9 + $0x18] sm:$0xff]
    %v137 = vld [vmem:[#allocation9 + $0x20] sm:$0xff]
    %v138 = vld [vmem:[#allocation9 + $0x28] sm:$0xff]
    %v139 = vld [vmem:[#allocation9 + $0x30] sm:$0xff]
    %v140 = vld [vmem:[#allocation9 + $0x38] sm:$0xff]
    %v141 = vld [vmem:[#allocation9 + $0x40] sm:$0xff]
    %v142 = vld [vmem:[#allocation9 + $0x48] sm:$0xff]
    %v143 = vld [vmem:[#allocation9 + $0x50] sm:$0xff]
    %v144 = vld [vmem:[#allocation9 + $0x58] sm:$0xff]
    %v145 = vld [vmem:[#allocation9 + $0x60] sm:$0xff]
    %v146 = vld [vmem:[#allocation9 + $0x68] sm:$0xff]
    %v147 = vld [vmem:[#allocation9 + $0x70] sm:$0xff]
    %v148 = vld [vmem:[#allocation9 + $0x78] sm:$0xff]
    %v149 = vld [vmem:[#allocation9 + $0x80] sm:$0xff]
    %v150 = vld [vmem:[#allocation9 + $0x88] sm:$0xff]
    %v151 = vld [vmem:[#allocation9 + $0x90] sm:$0xff]
    %v152 = vld [vmem:[#allocation9 + $0x98] sm:$0xff]
    %v153 = vld [vmem:[#allocation9 + $0xa0] sm:$0xff]
    %v154 = vld [vmem:[#allocation9 + $0xa8] sm:$0xff]
    %v155 = vld [vmem:[#allocation9 + $0xb0] sm:$0xff]
    %v156 = vld [vmem:[#allocation9 + $0xb8] sm:$0xff]
    %v157 = vld [vmem:[#allocation9 + $0xc0] sm:$0xff]
    %v158 = vld [vmem:[#allocation9 + $0xc8] sm:$0xff]
    %v159 = vld [vmem:[#allocation9 + $0xd0] sm:$0xff]
    %v160 = vld [vmem:[#allocation9 + $0xd8] sm:$0xff]
    %v161 = vld [vmem:[#allocation9 + $0xe0] sm:$0xff]
    %v162 = vld [vmem:[#allocation9 + $0xe8] sm:$0xff]
    %v163 = vld [vmem:[#allocation9 + $0xf0] sm:$0xff]
    %v164 = vld [vmem:[#allocation9 + $0xf8] sm:$0xff]
    %v165 = vld [vmem:[#allocation9 + $0x100] sm:$0xff]
    %v166 = vld [vmem:[#allocation9 + $0x108] sm:$0xff]
    %v167 = vld [vmem:[#allocation9 + $0x110] sm:$0xff]
    %v168 = vld [vmem:[#allocation9 + $0x118] sm:$0xff]
    %v169 = vld [vmem:[#allocation9 + $0x120] sm:$0xff]
    %v170 = vld [vmem:[#allocation9 + $0x128] sm:$0xff]
    %v171 = vld [vmem:[#allocation9 + $0x130] sm:$0xff]
    %v172 = vld [vmem:[#allocation9 + $0x138] sm:$0xff]
    %v173 = vld [vmem:[#allocation9 + $0x140] sm:$0xff]
    %v174 = vld [vmem:[#allocation9 + $0x148] sm:$0xff]
    %v175 = vld [vmem:[#allocation9 + $0x150] sm:$0xff]
    %v176 = vld [vmem:[#allocation9 + $0x158] sm:$0xff]
    %v177 = vld [vmem:[#allocation9 + $0x160] sm:$0xff]
    %v178 = vld [vmem:[#allocation9 + $0x168] sm:$0xff]
    %v179 = vld [vmem:[#allocation9 + $0x170] sm:$0xff]
    %v180 = vld [vmem:[#allocation9 + $0x178] sm:$0xff]
    %v181 = vld [vmem:[#allocation9 + $0x180] sm:$0xff]
    %v182 = vld [vmem:[#allocation9 + $0x188] sm:$0xff]
    %v183 = vld [vmem:[#allocation9 + $0x190] sm:$0xff]
    %v184 = vld [vmem:[#allocation9 + $0x198] sm:$0xff]
    %v185 = vld [vmem:[#allocation9 + $0x1a0] sm:$0xff]
    %v186 = vld [vmem:[#allocation9 + $0x1a8] sm:$0xff]
    %v187 = vld [vmem:[#allocation9 + $0x1b0] sm:$0xff]
    %v188 = vld [vmem:[#allocation9 + $0x1b8] sm:$0xff]
    %v189 = vld [vmem:[#allocation9 + $0x1c0] sm:$0xff]
    %v190 = vld [vmem:[#allocation9 + $0x1c8] sm:$0xff]
    %v191 = vld [vmem:[#allocation9 + $0x1d0] sm:$0xff]
    %v192 = vld [vmem:[#allocation9 + $0x1d8] sm:$0xff]
    %v193 = vld [vmem:[#allocation9 + $0x1e0] sm:$0xff]
    %v194 = vld [vmem:[#allocation9 + $0x1e8] sm:$0xff]
    %v195 = vld [vmem:[#allocation9 + $0x1f0] sm:$0xff]
    %v196 = vld [vmem:[#allocation9 + $0x1f8] sm:$0xff]
    %197 = vmatprep.subr.mxu0 %v194
    %198 = vmatpush1.msra.mxu0 %v193
    %199 = vmatprep.subr.mxu0 %v190
    %200 = vmatpush1.msra.mxu0 %v189
    %201 = vmatprep.subr.mxu0 %v186
    %202 = vmatpush1.msra.mxu0 %v185
    %203 = vmatprep.subr.mxu0 %v182
    %204 = vmatpush1.msra.mxu0 %v181
    %205 = vmatprep.subr.mxu0 %v178
    %206 = vmatpush1.msra.mxu0 %v177
    %207 = vmatprep.subr.mxu0 %v174
    %208 = vmatpush1.msra.mxu0 %v173
    %209 = vmatprep.subr.mxu0 %v170
    %210 = vmatpush1.msra.mxu0 %v169
    %211 = vmatprep.subr.mxu0 %v166
    %212 = vmatpush1.msra.mxu0 %v165
    %213 = vmatprep.subr.mxu0 %v162
    %214 = vmatpush1.msra.mxu0 %v161
    %215 = vmatprep.subr.mxu0 %v158
    %216 = vmatpush1.msra.mxu0 %v157
    %217 = vmatprep.subr.mxu0 %v154
    %218 = vmatpush1.msra.mxu0 %v153
    %219 = vmatprep.subr.mxu0 %v150
    %220 = vmatpush1.msra.mxu0 %v149
    %221 = vmatprep.subr.mxu0 %v146
    %222 = vmatpush1.msra.mxu0 %v145
    %223 = vmatprep.subr.mxu0 %v142
    %224 = vmatpush1.msra.mxu0 %v141
    %225 = vmatprep.subr.mxu0 %v138
    %226 = vmatpush1.msra.mxu0 %v137
    %227 = vmatprep.subr.mxu0 %v134
    %228 = vmatpush1.msra.mxu0 %v133
    %229 = vmatprep.subr.mxu0 0.0
    %230 = vmatpush2.msra.mxu0 0.0
    %231 = vmatprep.subr.mxu0 0.0
    %232 = vmatpush2.msra.mxu0 0.0
    %233 = vmatprep.subr.mxu0 0.0
    %234 = vmatpush2.msra.mxu0 0.0
    %235 = vmatprep.subr.mxu0 0.0
    %236 = vmatpush2.msra.mxu0 0.0
    %237 = vmatprep.subr.mxu0 0.0
    %238 = vmatpush2.msra.mxu0 0.0
    %239 = vmatprep.subr.mxu0 0.0
    %240 = vmatpush2.msra.mxu0 0.0
    %241 = vmatprep.subr.mxu0 0.0
    %242 = vmatpush2.msra.mxu0 0.0
    %243 = vmatprep.subr.mxu0 0.0
    %244 = vmatpush2.msra.mxu0 0.0
    %245 = vmatprep.subr.mxu0 0.0
    %246 = vmatpush2.msra.mxu0 0.0
    %247 = vmatprep.subr.mxu0 0.0
    %248 = vmatpush2.msra.mxu0 0.0
    %249 = vmatprep.subr.mxu0 0.0
    %250 = vmatpush2.msra.mxu0 0.0
    %251 = vmatprep.subr.mxu0 0.0
    %252 = vmatpush2.msra.mxu0 0.0
    %253 = vmatprep.subr.mxu0 0.0
    %254 = vmatpush2.msra.mxu0 0.0
    %255 = vmatprep.subr.mxu0 0.0
    %256 = vmatpush2.msra.mxu0 0.0
    %257 = vmatprep.subr.mxu0 0.0
    %258 = vmatpush2.msra.mxu0 0.0
    %259 = vmatprep.subr.mxu0 0.0
    %260 = vmatpush2.msra.mxu0 0.0
    %261 = vmatprep.mubr.f32.mxu0 0.0
    %262 = vmatmul.mubr.f32.gmra.mxu0 %v128
    %v263 = vpop.f32.mrf.mxu0
    %v264 = vadd.f32 0.0, %v263
    %v265 = vpop.f32.mrf.mxu0
    %v266 = vadd.f32 0.0, %v265
    %267 = vdwg.mxu0
    %268 = vmatprep.subr.mxu0 %v196
    %269 = vmatpush1.msra.mxu0 %v195
    %270 = vmatprep.subr.mxu0 %v192
    %271 = vmatpush1.msra.mxu0 %v191
    %272 = vmatprep.subr.mxu0 %v188
    %273 = vmatpush1.msra.mxu0 %v187
    %274 = vmatprep.subr.mxu0 %v184
    %275 = vmatpush1.msra.mxu0 %v183
    %276 = vmatprep.subr.mxu0 %v180
    %277 = vmatpush1.msra.mxu0 %v179
    %278 = vmatprep.subr.mxu0 %v176
    %279 = vmatpush1.msra.mxu0 %v175
    %280 = vmatprep.subr.mxu0 %v172
    %281 = vmatpush1.msra.mxu0 %v171
    %282 = vmatprep.subr.mxu0 %v168
    %283 = vmatpush1.msra.mxu0 %v167
    %284 = vmatprep.subr.mxu0 %v164
    %285 = vmatpush1.msra.mxu0 %v163
    %286 = vmatprep.subr.mxu0 %v160
    %287 = vmatpush1.msra.mxu0 %v159
    %288 = vmatprep.subr.mxu0 %v156
    %289 = vmatpush1.msra.mxu0 %v155
    %290 = vmatprep.subr.mxu0 %v152
    %291 = vmatpush1.msra.mxu0 %v151
    %292 = vmatprep.subr.mxu0 %v148
    %293 = vmatpush1.msra.mxu0 %v147
    %294 = vmatprep.subr.mxu0 %v144
    %295 = vmatpush1.msra.mxu0 %v143
    %296 = vmatprep.subr.mxu0 %v140
    %297 = vmatpush1.msra.mxu0 %v139
    %298 = vmatprep.subr.mxu0 %v136
    %299 = vmatpush1.msra.mxu0 %v135
    %300 = vmatprep.subr.mxu0 0.0
    %301 = vmatpush2.msra.mxu0 0.0
    %302 = vmatprep.subr.mxu0 0.0
    %303 = vmatpush2.msra.mxu0 0.0
    %304 = vmatprep.subr.mxu0 0.0
    %305 = vmatpush2.msra.mxu0 0.0
    %306 = vmatprep.subr.mxu0 0.0
    %307 = vmatpush2.msra.mxu0 0.0
    %308 = vmatprep.subr.mxu0 0.0
    %309 = vmatpush2.msra.mxu0 0.0
    %310 = vmatprep.subr.mxu0 0.0
    %311 = vmatpush2.msra.mxu0 0.0
    %312 = vmatprep.subr.mxu0 0.0
    %313 = vmatpush2.msra.mxu0 0.0
    %314 = vmatprep.subr.mxu0 0.0
    %315 = vmatpush2.msra.mxu0 0.0
    %316 = vmatprep.subr.mxu0 0.0
    %317 = vmatpush2.msra.mxu0 0.0
    %318 = vmatprep.subr.mxu0 0.0
    %319 = vmatpush2.msra.mxu0 0.0
    %320 = vmatprep.subr.mxu0 0.0
    %321 = vmatpush2.msra.mxu0 0.0
    %322 = vmatprep.subr.mxu0 0.0
    %323 = vmatpush2.msra.mxu0 0.0
    %324 = vmatprep.subr.mxu0 0.0
    %325 = vmatpush2.msra.mxu0 0.0
    %326 = vmatprep.subr.mxu0 0.0
    %327 = vmatpush2.msra.mxu0 0.0
    %328 = vmatprep.subr.mxu0 0.0
    %329 = vmatpush2.msra.mxu0 0.0
    %330 = vmatprep.subr.mxu0 0.0
    %331 = vmatpush2.msra.mxu0 0.0
    %332 = vmatprep.mubr.f32.mxu0 0.0
    %333 = vmatmul.mubr.f32.gmra.mxu0 %v128
    %v334 = vpop.f32.mrf.mxu0
    %v335 = vadd.f32 0.0, %v334
    %v336 = vpop.f32.mrf.mxu0
    %v337 = vadd.f32 0.0, %v336
    %338 = vdwg.mxu0
    %v339 = vadd.f32 %v129, %v264
    %v340 = vadd.f32 %v130, %v266
    %v341 = vadd.f32 %v131, %v335
    %v342 = vadd.f32 %v132, %v337
    %343 = vst [vmem:[#allocation2] sm:$0xff] %v339
    %344 = vst [vmem:[#allocation2 + $0x8] sm:$0xff] %v340
    %345 = vst [vmem:[#allocation2 + $0x10] sm:$0xff] %v341
    %346 = vst [vmem:[#allocation2 + $0x18] sm:$0xff] %v342
    // Predicated region
    $region70: #{tpu_custom_call.1} parent=1 // pred_check
      %p347 = pneg %p108
    $region71: #{tpu_custom_call.1} parent=1 // pred_check_branch
      %349 = sbr.rel (%p347) target = $region73
    $region72: #{tpu_custom_call.1} parent=1 // pred_region
      %v350 = vld [vmem:[#allocation2] sm:$0xff]
      %v351 = vld [vmem:[#allocation2 + $0x8] sm:$0xff]
      %v352 = vld [vmem:[#allocation2 + $0x10] sm:$0xff]
      %v353 = vld [vmem:[#allocation2 + $0x18] sm:$0xff]
      %v354 = vrot.slane %v350, 4
      %v355 = vadd.f32 %v350, %v354
      %v356 = vrot.slane %v355, 2
      %v357 = vadd.f32 %v355, %v356
      %v358 = vrot.slane %v357, 1
      %v359 = vadd.f32 %v357, %v358
      %v360 = vrot.slane %v351, 4
      %v361 = vadd.f32 %v351, %v360
      %v362 = vrot.slane %v361, 2
      %v363 = vadd.f32 %v361, %v362
      %v364 = vrot.slane %v363, 1
      %v365 = vadd.f32 %v363, %v364
      %v366 = vrot.slane %v352, 4
      %v367 = vadd.f32 %v352, %v366
      %v368 = vrot.slane %v367, 2
      %v369 = vadd.f32 %v367, %v368
      %v370 = vrot.slane %v369, 1
      %v371 = vadd.f32 %v369, %v370
      %v372 = vrot.slane %v353, 4
      %v373 = vadd.f32 %v353, %v372
      %v374 = vrot.slane %v373, 2
      %v375 = vadd.f32 %v373, %v374
      %v376 = vrot.slane %v375, 1
      %v377 = vadd.f32 %v375, %v376
      %v378 = vrcp.pop 8.0
      %v379 = vmul.f32 %v359, %v378
      %v380 = vmul.f32 %v365, %v378
      %v381 = vmul.f32 %v371, %v378
      %v382 = vmul.f32 %v377, %v378
      %v383 = vsub.f32 %v350, %v379
      %v384 = vsub.f32 %v351, %v380
      %v385 = vsub.f32 %v352, %v381
      %v386 = vsub.f32 %v353, %v382
      %v387 = vmul.f32 %v383, %v383
      %v388 = vmul.f32 %v384, %v384
      %v389 = vmul.f32 %v385, %v385
      %v390 = vmul.f32 %v386, %v386
      %v391 = vrot.slane %v387, 4
      %v392 = vadd.f32 %v387, %v391
      %v393 = vrot.slane %v392, 2
      %v394 = vadd.f32 %v392, %v393
      %v395 = vrot.slane %v394, 1
      %v396 = vadd.f32 %v394, %v395
      %v397 = vrot.slane %v388, 4
      %v398 = vadd.f32 %v388, %v397
      %v399 = vrot.slane %v398, 2
      %v400 = vadd.f32 %v398, %v399
      %v401 = vrot.slane %v400, 1
      %v402 = vadd.f32 %v400, %v401
      %v403 = vrot.slane %v389, 4
      %v404 = vadd.f32 %v389, %v403
      %v405 = vrot.slane %v404, 2
      %v406 = vadd.f32 %v404, %v405
      %v407 = vrot.slane %v406, 1
      %v408 = vadd.f32 %v406, %v407
      %v409 = vrot.slane %v390, 4
      %v410 = vadd.f32 %v390, %v409
      %v411 = vrot.slane %v410, 2
      %v412 = vadd.f32 %v410, %v411
      %v413 = vrot.slane %v412, 1
      %v414 = vadd.f32 %v412, %v413
      %v415 = vmul.f32 %v396, %v378
      %v416 = vmul.f32 %v402, %v378
      %v417 = vmul.f32 %v408, %v378
      %v418 = vmul.f32 %v414, %v378
      %v419 = vld [vmem:[%s4] sm:$0xf]
      %v420 = vadd.f32 %v415, 1e-05
      %v421 = vadd.f32 %v416, 1e-05
      %v422 = vadd.f32 %v417, 1e-05
      %v423 = vadd.f32 %v418, 1e-05
      %v424 = vrsqrt.pop %v420
      %v425 = vrsqrt.pop %v421
      %v426 = vrsqrt.pop %v422
      %v427 = vrsqrt.pop %v423
      %v432 = vcombine.low %v424, %v425
      %v433 = vcombine.low %v426, %v427
      %v435 = vunpack.c.l.s4 1966171168
      %v436 = vunpack.c.0.s8 %v435
      %v437 = vlaneseq
      %v438 = vshrl.u32 %v437, 7
      %v439 = vsub.s32 %v436, %v438
      %v440 = vrot.slane %v432, %v439
      %v442 = vunpack.c.l.s4 1966171168
      %v443 = vunpack.c.0.s8 %v442
      %v444 = vlaneseq
      %v445 = vshrl.u32 %v444, 7
      %v446 = vsub.s32 %v443, %v445
      %v447 = vrot.slane %v433, %v446
      %v448 = vcombine.low %v440, %v447
      %v450 = vunpack.c.l.s4 1966171168
      %v451 = vunpack.c.0.s8 %v450
      %v452 = vlaneseq
      %v453 = vshrl.u32 %v452, 7
      %v454 = vsub.s32 %v451, %v453
      %v455 = vrot.slane %v448, %v454
      %v457 = vmul.f32 %v419, %v455
      %v458 = vld [vmem:[%s5] sm:$0xf]
      %v460 = vlaneseq
      %v461 = vshrl.u32 %v460, 7
      %v462 = vsub.s32 0, %v461
      %v463 = vrot.slane %v457, %v462
      %v464 = vlaneseq
      %v465 = vshrl.u32 %v464, 7
      %v466 = vsub.s32 1, %v465
      %v467 = vrot.slane %v457, %v466
      %v468 = vlaneseq
      %v469 = vshrl.u32 %v468, 7
      %v470 = vsub.s32 2, %v469
      %v471 = vrot.slane %v457, %v470
      %v472 = vlaneseq
      %v473 = vshrl.u32 %v472, 7
      %v474 = vsub.s32 3, %v473
      %v475 = vrot.slane %v457, %v474
      %v480 = vmul.f32 %v379, %v463
      %v481 = vmul.f32 %v380, %v467
      %v482 = vmul.f32 %v381, %v471
      %v483 = vmul.f32 %v382, %v475
      %v488 = vcombine.low %v480, %v481
      %v489 = vcombine.low %v482, %v483
      %v491 = vunpack.c.l.s4 1966171168
      %v492 = vunpack.c.0.s8 %v491
      %v493 = vlaneseq
      %v494 = vshrl.u32 %v493, 7
      %v495 = vsub.s32 %v492, %v494
      %v496 = vrot.slane %v488, %v495
      %v498 = vunpack.c.l.s4 1966171168
      %v499 = vunpack.c.0.s8 %v498
      %v500 = vlaneseq
      %v501 = vshrl.u32 %v500, 7
      %v502 = vsub.s32 %v499, %v501
      %v503 = vrot.slane %v489, %v502
      %v504 = vcombine.low %v496, %v503
      %v506 = vunpack.c.l.s4 1966171168
      %v507 = vunpack.c.0.s8 %v506
      %v508 = vlaneseq
      %v509 = vshrl.u32 %v508, 7
      %v510 = vsub.s32 %v507, %v509
      %v511 = vrot.slane %v504, %v510
      %v513 = vsub.f32 %v458, %v511
      %v514 = vmul.f32 %v350, %v463
      %v515 = vmul.f32 %v351, %v467
      %v516 = vmul.f32 %v352, %v471
      %v517 = vmul.f32 %v353, %v475
      %v519 = vlaneseq
      %v520 = vshrl.u32 %v519, 7
      %v521 = vsub.s32 0, %v520
      %v522 = vrot.slane %v513, %v521
      %v523 = vlaneseq
      %v524 = vshrl.u32 %v523, 7
      %v525 = vsub.s32 1, %v524
      %v526 = vrot.slane %v513, %v525
      %v527 = vlaneseq
      %v528 = vshrl.u32 %v527, 7
      %v529 = vsub.s32 2, %v528
      %v530 = vrot.slane %v513, %v529
      %v531 = vlaneseq
      %v532 = vshrl.u32 %v531, 7
      %v533 = vsub.s32 3, %v532
      %v534 = vrot.slane %v513, %v533
      %v539 = vadd.f32 %v514, %v522
      %v540 = vadd.f32 %v515, %v526
      %v541 = vadd.f32 %v516, %v530
      %v542 = vadd.f32 %v517, %v534
      %v543 = vmax.f32 %v539, 0.0
      %v544 = vmax.f32 %v540, 0.0
      %v545 = vmax.f32 %v541, 0.0
      %v546 = vmax.f32 %v542, 0.0
      %v547 = vld [vmem:[#allocation11] sm:$0xff]
      %v548 = vld [vmem:[#allocation11 + $0x8] sm:$0xff]
      %v549 = vld [vmem:[#allocation11 + $0x10] sm:$0xff]
      %v550 = vld [vmem:[#allocation11 + $0x18] sm:$0xff]
      %v551 = vld [vmem:[#allocation11 + $0x20] sm:$0xff]
      %v552 = vld [vmem:[#allocation11 + $0x28] sm:$0xff]
      %v553 = vld [vmem:[#allocation11 + $0x30] sm:$0xff]
      %v554 = vld [vmem:[#allocation11 + $0x38] sm:$0xff]
      %v555 = vld [vmem:[#allocation11 + $0x40] sm:$0xff]
      %v556 = vld [vmem:[#allocation11 + $0x48] sm:$0xff]
      %v557 = vld [vmem:[#allocation11 + $0x50] sm:$0xff]
      %v558 = vld [vmem:[#allocation11 + $0x58] sm:$0xff]
      %v559 = vld [vmem:[#allocation11 + $0x60] sm:$0xff]
      %v560 = vld [vmem:[#allocation11 + $0x68] sm:$0xff]
      %v561 = vld [vmem:[#allocation11 + $0x70] sm:$0xff]
      %v562 = vld [vmem:[#allocation11 + $0x78] sm:$0xff]
      %v563 = vld [vmem:[#allocation11 + $0x80] sm:$0xff]
      %v564 = vld [vmem:[#allocation11 + $0x88] sm:$0xff]
      %v565 = vld [vmem:[#allocation11 + $0x90] sm:$0xff]
      %v566 = vld [vmem:[#allocation11 + $0x98] sm:$0xff]
      %v567 = vld [vmem:[#allocation11 + $0xa0] sm:$0xff]
      %v568 = vld [vmem:[#allocation11 + $0xa8] sm:$0xff]
      %v569 = vld [vmem:[#allocation11 + $0xb0] sm:$0xff]
      %v570 = vld [vmem:[#allocation11 + $0xb8] sm:$0xff]
      %v571 = vld [vmem:[#allocation11 + $0xc0] sm:$0xff]
      %v572 = vld [vmem:[#allocation11 + $0xc8] sm:$0xff]
      %v573 = vld [vmem:[#allocation11 + $0xd0] sm:$0xff]
      %v574 = vld [vmem:[#allocation11 + $0xd8] sm:$0xff]
      %v575 = vld [vmem:[#allocation11 + $0xe0] sm:$0xff]
      %v576 = vld [vmem:[#allocation11 + $0xe8] sm:$0xff]
      %v577 = vld [vmem:[#allocation11 + $0xf0] sm:$0xff]
      %v578 = vld [vmem:[#allocation11 + $0xf8] sm:$0xff]
      %v579 = vld [vmem:[#allocation11 + $0x100] sm:$0xff]
      %v580 = vld [vmem:[#allocation11 + $0x108] sm:$0xff]
      %v581 = vld [vmem:[#allocation11 + $0x110] sm:$0xff]
      %v582 = vld [vmem:[#allocation11 + $0x118] sm:$0xff]
      %v583 = vld [vmem:[#allocation11 + $0x120] sm:$0xff]
      %v584 = vld [vmem:[#allocation11 + $0x128] sm:$0xff]
      %v585 = vld [vmem:[#allocation11 + $0x130] sm:$0xff]
      %v586 = vld [vmem:[#allocation11 + $0x138] sm:$0xff]
      %v587 = vld [vmem:[#allocation11 + $0x140] sm:$0xff]
      %v588 = vld [vmem:[#allocation11 + $0x148] sm:$0xff]
      %v589 = vld [vmem:[#allocation11 + $0x150] sm:$0xff]
      %v590 = vld [vmem:[#allocation11 + $0x158] sm:$0xff]
      %v591 = vld [vmem:[#allocation11 + $0x160] sm:$0xff]
      %v592 = vld [vmem:[#allocation11 + $0x168] sm:$0xff]
      %v593 = vld [vmem:[#allocation11 + $0x170] sm:$0xff]
      %v594 = vld [vmem:[#allocation11 + $0x178] sm:$0xff]
      %v595 = vld [vmem:[#allocation11 + $0x180] sm:$0xff]
      %v596 = vld [vmem:[#allocation11 + $0x188] sm:$0xff]
      %v597 = vld [vmem:[#allocation11 + $0x190] sm:$0xff]
      %v598 = vld [vmem:[#allocation11 + $0x198] sm:$0xff]
      %v599 = vld [vmem:[#allocation11 + $0x1a0] sm:$0xff]
      %v600 = vld [vmem:[#allocation11 + $0x1a8] sm:$0xff]
      %v601 = vld [vmem:[#allocation11 + $0x1b0] sm:$0xff]
      %v602 = vld [vmem:[#allocation11 + $0x1b8] sm:$0xff]
      %v603 = vld [vmem:[#allocation11 + $0x1c0] sm:$0xff]
      %v604 = vld [vmem:[#allocation11 + $0x1c8] sm:$0xff]
      %v605 = vld [vmem:[#allocation11 + $0x1d0] sm:$0xff]
      %v606 = vld [vmem:[#allocation11 + $0x1d8] sm:$0xff]
      %v607 = vld [vmem:[#allocation11 + $0x1e0] sm:$0xff]
      %v608 = vld [vmem:[#allocation11 + $0x1e8] sm:$0xff]
      %v609 = vld [vmem:[#allocation11 + $0x1f0] sm:$0xff]
      %v610 = vld [vmem:[#allocation11 + $0x1f8] sm:$0xff]
      %611 = vmatprep.subr.mxu0 0.0
      %612 = vmatpush1.msra.mxu0 %v562
      %613 = vmatprep.subr.mxu0 0.0
      %614 = vmatpush1.msra.mxu0 %v561
      %615 = vmatprep.subr.mxu0 0.0
      %616 = vmatpush1.msra.mxu0 %v560
      %617 = vmatprep.subr.mxu0 0.0
      %618 = vmatpush1.msra.mxu0 %v559
      %619 = vmatprep.subr.mxu0 0.0
      %620 = vmatpush1.msra.mxu0 %v558
      %621 = vmatprep.subr.mxu0 0.0
      %622 = vmatpush1.msra.mxu0 %v557
      %623 = vmatprep.subr.mxu0 0.0
      %624 = vmatpush1.msra.mxu0 %v556
      %625 = vmatprep.subr.mxu0 0.0
      %626 = vmatpush1.msra.mxu0 %v555
      %627 = vmatprep.subr.mxu0 0.0
      %628 = vmatpush1.msra.mxu0 %v554
      %629 = vmatprep.subr.mxu0 0.0
      %630 = vmatpush1.msra.mxu0 %v553
      %631 = vmatprep.subr.mxu0 0.0
      %632 = vmatpush1.msra.mxu0 %v552
      %633 = vmatprep.subr.mxu0 0.0
      %634 = vmatpush1.msra.mxu0 %v551
      %635 = vmatprep.subr.mxu0 0.0
      %636 = vmatpush1.msra.mxu0 %v550
      %637 = vmatprep.subr.mxu0 0.0
      %638 = vmatpush1.msra.mxu0 %v549
      %639 = vmatprep.subr.mxu0 0.0
      %640 = vmatpush1.msra.mxu0 %v548
      %641 = vmatprep.subr.mxu0 0.0
      %642 = vmatpush1.msra.mxu0 %v547
      %643 = vmatprep.subr.mxu0 0.0
      %644 = vmatpush2.msra.mxu0 %v578
      %645 = vmatprep.subr.mxu0 0.0
      %646 = vmatpush2.msra.mxu0 %v577
      %647 = vmatprep.subr.mxu0 0.0
      %648 = vmatpush2.msra.mxu0 %v576
      %649 = vmatprep.subr.mxu0 0.0
      %650 = vmatpush2.msra.mxu0 %v575
      %651 = vmatprep.subr.mxu0 0.0
      %652 = vmatpush2.msra.mxu0 %v574
      %653 = vmatprep.subr.mxu0 0.0
      %654 = vmatpush2.msra.mxu0 %v573
      %655 = vmatprep.subr.mxu0 0.0
      %656 = vmatpush2.msra.mxu0 %v572
      %657 = vmatprep.subr.mxu0 0.0
      %658 = vmatpush2.msra.mxu0 %v571
      %659 = vmatprep.subr.mxu0 0.0
      %660 = vmatpush2.msra.mxu0 %v570
      %661 = vmatprep.subr.mxu0 0.0
      %662 = vmatpush2.msra.mxu0 %v569
      %663 = vmatprep.subr.mxu0 0.0
      %664 = vmatpush2.msra.mxu0 %v568
      %665 = vmatprep.subr.mxu0 0.0
      %666 = vmatpush2.msra.mxu0 %v567
      %667 = vmatprep.subr.mxu0 0.0
      %668 = vmatpush2.msra.mxu0 %v566
      %669 = vmatprep.subr.mxu0 0.0
      %670 = vmatpush2.msra.mxu0 %v565
      %671 = vmatprep.subr.mxu0 0.0
      %672 = vmatpush2.msra.mxu0 %v564
      %673 = vmatprep.subr.mxu0 0.0
      %674 = vmatpush2.msra.mxu0 %v563
      %675 = vmatprep.mubr.f32.mxu0 %v544
      %676 = vmatmul.mubr.f32.gmra.mxu0 %v543
      %v677 = vpop.f32.mrf.mxu0
      %v678 = vadd.f32 0.0, %v677
      %v679 = vpop.f32.mrf.mxu0
      %680 = vdwg.mxu0
      %681 = vmatprep.subr.mxu0 0.0
      %682 = vmatpush1.msra.mxu0 %v594
      %683 = vmatprep.subr.mxu0 0.0
      %684 = vmatpush1.msra.mxu0 %v593
      %685 = vmatprep.subr.mxu0 0.0
      %686 = vmatpush1.msra.mxu0 %v592
      %687 = vmatprep.subr.mxu0 0.0
      %688 = vmatpush1.msra.mxu0 %v591
      %689 = vmatprep.subr.mxu0 0.0
      %690 = vmatpush1.msra.mxu0 %v590
      %691 = vmatprep.subr.mxu0 0.0
      %692 = vmatpush1.msra.mxu0 %v589
      %693 = vmatprep.subr.mxu0 0.0
      %694 = vmatpush1.msra.mxu0 %v588
      %695 = vmatprep.subr.mxu0 0.0
      %696 = vmatpush1.msra.mxu0 %v587
      %697 = vmatprep.subr.mxu0 0.0
      %698 = vmatpush1.msra.mxu0 %v586
      %699 = vmatprep.subr.mxu0 0.0
      %700 = vmatpush1.msra.mxu0 %v585
      %701 = vmatprep.subr.mxu0 0.0
      %702 = vmatpush1.msra.mxu0 %v584
      %703 = vmatprep.subr.mxu0 0.0
      %704 = vmatpush1.msra.mxu0 %v583
      %705 = vmatprep.subr.mxu0 0.0
      %706 = vmatpush1.msra.mxu0 %v582
      %707 = vmatprep.subr.mxu0 0.0
      %708 = vmatpush1.msra.mxu0 %v581
      %709 = vmatprep.subr.mxu0 0.0
      %710 = vmatpush1.msra.mxu0 %v580
      %711 = vmatprep.subr.mxu0 0.0
      %712 = vmatpush1.msra.mxu0 %v579
      %713 = vmatprep.subr.mxu0 0.0
      %714 = vmatpush2.msra.mxu0 %v610
      %715 = vmatprep.subr.mxu0 0.0
      %716 = vmatpush2.msra.mxu0 %v609
      %717 = vmatprep.subr.mxu0 0.0
      %718 = vmatpush2.msra.mxu0 %v608
      %719 = vmatprep.subr.mxu0 0.0
      %720 = vmatpush2.msra.mxu0 %v607
      %721 = vmatprep.subr.mxu0 0.0
      %722 = vmatpush2.msra.mxu0 %v606
      %723 = vmatprep.subr.mxu0 0.0
      %724 = vmatpush2.msra.mxu0 %v605
      %725 = vmatprep.subr.mxu0 0.0
      %726 = vmatpush2.msra.mxu0 %v604
      %727 = vmatprep.subr.mxu0 0.0
      %728 = vmatpush2.msra.mxu0 %v603
      %729 = vmatprep.subr.mxu0 0.0
      %730 = vmatpush2.msra.mxu0 %v602
      %731 = vmatprep.subr.mxu0 0.0
      %732 = vmatpush2.msra.mxu0 %v601
      %733 = vmatprep.subr.mxu0 0.0
      %734 = vmatpush2.msra.mxu0 %v600
      %735 = vmatprep.subr.mxu0 0.0
      %736 = vmatpush2.msra.mxu0 %v599
      %737 = vmatprep.subr.mxu0 0.0
      %738 = vmatpush2.msra.mxu0 %v598
      %739 = vmatprep.subr.mxu0 0.0
      %740 = vmatpush2.msra.mxu0 %v597
      %741 = vmatprep.subr.mxu0 0.0
      %742 = vmatpush2.msra.mxu0 %v596
      %743 = vmatprep.subr.mxu0 0.0
      %744 = vmatpush2.msra.mxu0 %v595
      %745 = vmatprep.mubr.f32.mxu0 %v546
      %746 = vmatmul.mubr.f32.gmra.mxu0 %v545
      %v747 = vpop.f32.mrf.mxu0
      %v748 = vadd.f32 %v678, %v747
      %v749 = vpop.f32.mrf.mxu0
      %750 = vdwg.mxu0
      %v751 = vrot.slane %v748, 4
      %v752 = vadd.f32 %v748, %v751
      %v753 = vrot.slane %v752, 2
      %v754 = vadd.f32 %v752, %v753
      %v755 = vrot.slane %v754, 1
      %v756 = vadd.f32 %v754, %v755
      %v757 = vmul.f32 %v756, %v378
      %v758 = vsub.f32 %v748, %v757
      %v759 = vmul.f32 %v758, %v758
      %v760 = vrot.slane %v759, 4
      %v761 = vadd.f32 %v759, %v760
      %v762 = vrot.slane %v761, 2
      %v763 = vadd.f32 %v761, %v762
      %v764 = vrot.slane %v763, 1
      %v765 = vadd.f32 %v763, %v764
      %v766 = vmul.f32 %v765, %v378
      %v767 = vld [vmem:[%s7] sm:$0x1]
      %v768 = vadd.f32 %v766, 1e-05
      %v769 = vrsqrt.pop %v768
      %v770 = vmul.f32 %v767, %v769
      %v771 = vld [vmem:[%s8] sm:$0x1]
      %v772 = vmul.f32 %v757, %v770
      %v773 = vsub.f32 %v771, %v772
      %v775 = vlaneseq
      %v776 = vshrl.u32 %v775, 7
      %v777 = vsub.s32 0, %v776
      %v778 = vrot.slane %v770, %v777
      %v780 = vmul.f32 %v748, %v778
      %v782 = vlaneseq
      %v783 = vshrl.u32 %v782, 7
      %v784 = vsub.s32 0, %v783
      %v785 = vrot.slane %v773, %v784
      %v787 = vadd.f32 %v780, %v785
      %v788 = vmax.f32 %v787, 0.0
      %v789 = vld [vmem:[#allocation12] sm:$0xff]
      %v790 = vld [vmem:[#allocation12 + $0x8] sm:$0xff]
      %v791 = vld [vmem:[#allocation12 + $0x10] sm:$0xff]
      %v792 = vld [vmem:[#allocation12 + $0x18] sm:$0xff]
      %v793 = vld [vmem:[#allocation12 + $0x20] sm:$0xff]
      %v794 = vld [vmem:[#allocation12 + $0x28] sm:$0xff]
      %v795 = vld [vmem:[#allocation12 + $0x30] sm:$0xff]
      %v796 = vld [vmem:[#allocation12 + $0x38] sm:$0xff]
      %v797 = vld [vmem:[#allocation12 + $0x40] sm:$0xff]
      %v798 = vld [vmem:[#allocation12 + $0x48] sm:$0xff]
      %v799 = vld [vmem:[#allocation12 + $0x50] sm:$0xff]
      %v800 = vld [vmem:[#allocation12 + $0x58] sm:$0xff]
      %v801 = vld [vmem:[#allocation12 + $0x60] sm:$0xff]
      %v802 = vld [vmem:[#allocation12 + $0x68] sm:$0xff]
      %v803 = vld [vmem:[#allocation12 + $0x70] sm:$0xff]
      %v804 = vld [vmem:[#allocation12 + $0x78] sm:$0xff]
      %v805 = vld [vmem:[%s10] sm:$0x1]
      %v807 = vlaneseq
      %v808 = vshrl.u32 %v807, 7
      %v809 = vsub.s32 0, %v808
      %v810 = vrot.slane %v805, %v809
      %812 = vmatprep.subr.mxu0 0.0
      %813 = vmatpush1.msra.mxu0 %v804
      %814 = vmatprep.subr.mxu0 0.0
      %815 = vmatpush1.msra.mxu0 %v803
      %816 = vmatprep.subr.mxu0 0.0
      %817 = vmatpush1.msra.mxu0 %v802
      %818 = vmatprep.subr.mxu0 0.0
      %819 = vmatpush1.msra.mxu0 %v801
      %820 = vmatprep.subr.mxu0 0.0
      %821 = vmatpush1.msra.mxu0 %v800
      %822 = vmatprep.subr.mxu0 0.0
      %823 = vmatpush1.msra.mxu0 %v799
      %824 = vmatprep.subr.mxu0 0.0
      %825 = vmatpush1.msra.mxu0 %v798
      %826 = vmatprep.subr.mxu0 0.0
      %827 = vmatpush1.msra.mxu0 %v797
      %828 = vmatprep.subr.mxu0 0.0
      %829 = vmatpush1.msra.mxu0 %v796
      %830 = vmatprep.subr.mxu0 0.0
      %831 = vmatpush1.msra.mxu0 %v795
      %832 = vmatprep.subr.mxu0 0.0
      %833 = vmatpush1.msra.mxu0 %v794
      %834 = vmatprep.subr.mxu0 0.0
      %835 = vmatpush1.msra.mxu0 %v793
      %836 = vmatprep.subr.mxu0 0.0
      %837 = vmatpush1.msra.mxu0 %v792
      %838 = vmatprep.subr.mxu0 0.0
      %839 = vmatpush1.msra.mxu0 %v791
      %840 = vmatprep.subr.mxu0 0.0
      %841 = vmatpush1.msra.mxu0 %v790
      %842 = vmatprep.subr.mxu0 0.0
      %843 = vmatpush1.msra.mxu0 %v789
      %844 = vmatprep.subr.mxu0 0.0
      %845 = vmatpush2.msra.mxu0 0.0
      %846 = vmatprep.subr.mxu0 0.0
      %847 = vmatpush2.msra.mxu0 0.0
      %848 = vmatprep.subr.mxu0 0.0
      %849 = vmatpush2.msra.mxu0 0.0
      %850 = vmatprep.subr.mxu0 0.0
      %851 = vmatpush2.msra.mxu0 0.0
      %852 = vmatprep.subr.mxu0 0.0
      %853 = vmatpush2.msra.mxu0 0.0
      %854 = vmatprep.subr.mxu0 0.0
      %855 = vmatpush2.msra.mxu0 0.0
      %856 = vmatprep.subr.mxu0 0.0
      %857 = vmatpush2.msra.mxu0 0.0
      %858 = vmatprep.subr.mxu0 0.0
      %859 = vmatpush2.msra.mxu0 0.0
      %860 = vmatprep.subr.mxu0 0.0
      %861 = vmatpush2.msra.mxu0 0.0
      %862 = vmatprep.subr.mxu0 0.0
      %863 = vmatpush2.msra.mxu0 0.0
      %864 = vmatprep.subr.mxu0 0.0
      %865 = vmatpush2.msra.mxu0 0.0
      %866 = vmatprep.subr.mxu0 0.0
      %867 = vmatpush2.msra.mxu0 0.0
      %868 = vmatprep.subr.mxu0 0.0
      %869 = vmatpush2.msra.mxu0 0.0
      %870 = vmatprep.subr.mxu0 0.0
      %871 = vmatpush2.msra.mxu0 0.0
      %872 = vmatprep.subr.mxu0 0.0
      %873 = vmatpush2.msra.mxu0 0.0
      %874 = vmatprep.subr.mxu0 0.0
      %875 = vmatpush2.msra.mxu0 0.0
      %876 = vmatprep.mubr.f32.mxu0 0.0
      %877 = vmatmul.mubr.f32.gmra.mxu0 %v788
      %v878 = vpop.f32.mrf.mxu0
      %v879 = vadd.f32 %v810, %v878
      %v880 = vpop.f32.mrf.mxu0
      %881 = vdwg.mxu0
      %882 = vst [vmem:[#allocation14] sm:$0xff] %v879
    $region73: #{tpu_custom_call.1} parent=1 // pred_fallthru
      _
    // Predicated region
    $region74: #{tpu_custom_call.1} parent=1 // pred_check
      _
    $region75: #{tpu_custom_call.1} parent=1 // pred_check_branch
      %884 = sbr.rel (0) target = $region77
    $region76: #{tpu_custom_call.1} parent=1 // pred_region
      %s886 = ssub.s32 128, 128
      %887 = vsyncadd [#allocation6], %s886
      %s889 = sshll.u32 [#allocation14], 4
      %s890 = int_to_ptr.vmem [resolvable:$true] %s889
      %892 = dma.vmem_to_hbm [thread:$0]  %s890, 128, %s11, [#allocation6]
    $region77: #{tpu_custom_call.1} parent=1 // pred_fallthru
      _
    // Predicated region
    $region78: #{tpu_custom_call.1} parent=1 // pred_check
      _
    $region79: #{tpu_custom_call.1} parent=1 // pred_check_branch
      %894 = sbr.rel (0) target = $region81
    $region80: #{tpu_custom_call.1} parent=1 // pred_region
      %895 = dma.done [#allocation6], 128
    $region81: #{tpu_custom_call.1} parent=1 // pred_fallthru
      _
    %896 = vsyncpa [#allocation5], 1
    %897 = vsyncpa [#allocation10], 1
    %898 = vsyncpa [#allocation13], 1
    %899 = vsyncpa [#allocation6], 1
    %900 = vsyncpa [#allocation7], 1

</llo_original>
